<compile_context>
chip_gen: v7x
topology: tpu7x:2x2x1
jax: 0.10.0
libtpu: 0.0.40
codegen_flags: <defaults>
</compile_context>

<pallas_src>
import numpy as np
import jax
import jax.numpy as jnp
from jax import lax
from jax.experimental import pallas as pl
from jax.experimental.pallas import tpu as pltpu


def _cdiv(a: int, b: int) -> int:
    return -(-a // b)


def _round_up(x: int, m: int) -> int:
    return _cdiv(x, m) * m


def _min_sublane(dtype) -> int:
    # Minimum sublane tile: 8 for 4-byte, 16 for 2-byte, 32 for 1-byte dtypes.
    return {4: 8, 2: 16, 1: 32}.get(jnp.dtype(dtype).itemsize, 8)


def _patch_embed_kernel(p_ref, w_ref, b_ref, o_ref, acc_ref):
    # p_ref:  (TM, TK) patch rows          w_ref: (TK, TN) weight tile
    # b_ref:  (1, TN)  bias                o_ref: (TM, TN) lane-dense output
    # acc_ref:(TM, TN) f32 accumulator, persists across the K grid axis.
    @pl.when(pl.program_id(2) == 0)
    def _():
        acc_ref[...] = jnp.zeros_like(acc_ref)

    # Native MXU path (no HIGHEST multi-pass emulation); f32 accumulation.
    acc_ref[...] += jnp.dot(p_ref[...], w_ref[...],
                            preferred_element_type=jnp.float32)

    @pl.when(pl.program_id(2) == pl.num_programs(2) - 1)
    def _():
        o_ref[...] = (acc_ref[...] +
                      b_ref[...].astype(jnp.float32)).astype(o_ref.dtype)


def patch_embeddings_forward(x, weight, bias, patch_size):
    """x: (B, C, H, W), weight: (d_model, C, ph, pw), bias: (d_model,)
       -> (B, n_patches, d_model)   (matches PyTorch PatchEmbeddings.forward)."""
    B, C, H, W = x.shape
    ph, pw = patch_size
    d_model = weight.shape[0]
    Hp, Wp = H // ph, W // pw
    n_patches = Hp * Wp
    K = C * ph * pw
    M = B * n_patches

    # ---- tile sizing -----------------------------------------------------
    # Lane (last-dim) padding: 128 minimum; multiples of 256 when d_model>128
    # so each MXU pass fills the full 256-wide array on v6e/v7x.
    if d_model <= 128:
        N_pad, TN = 128, 128
    else:
        N_pad = _round_up(d_model, 256)
        TN = 512 if N_pad % 512 == 0 else 256
    K_pad = _round_up(K, 128)
    TK = max(t for t in (128, 256, 512) if K_pad % t == 0)

    # M tiling: big tiles (up to 512 rows) but chosen so padding waste stays
    # small and, when M allows, the grid has >= 2 parallel steps for v7x's
    # two TensorCores.
    TM_MAX = 512
    min_rows = _min_sublane(x.dtype)
    max_steps = max(1, M // min_rows)              # no pure-padding tiles
    n_steps = min(max(2, _cdiv(M, TM_MAX)), max_steps)
    TM = min(_round_up(_cdiv(M, n_steps), min_rows), TM_MAX)
    M_pad = _round_up(M, TM)

    grid = (M_pad // TM, N_pad // TN, K_pad // TK)

    # ---- wrapper-side layout plumbing (fuses under jit) -------------------
    # Row p = patch (b, hp, wp); element index c*ph*pw + kh*pw + kw — matches
    # weight.reshape(d_model, K).  Pad (jnp.pad) fuses onto the transpose.
    patches = (x.reshape(B, C, Hp, ph, Wp, pw)
                 .transpose(0, 2, 4, 1, 3, 5)       # (B, Hp, Wp, C, ph, pw)
                 .reshape(M, K))
    patches_p = jnp.pad(patches, ((0, M_pad - M), (0, K_pad - K)))
    w_p = jnp.pad(weight.reshape(d_model, K).T,
                  ((0, K_pad - K), (0, N_pad - d_model)))
    b_p = jnp.pad(bias.reshape(1, d_model), ((0, 0), (0, N_pad - d_model)))

    itemsize = jnp.dtype(x.dtype).itemsize
    # VMEM budget: double-buffered in/out tiles + f32 accumulator + margin;
    # >= 32 MiB, capped at 64 MiB (v7x physical per-TC VMEM).
    vmem_needed = (2 * (TM * TK + TK * TN + TN) * itemsize   # inputs (2 bufs)
                   + 2 * TM * TN * itemsize                  # output (2 bufs)
                   + TM * TN * 4)                            # f32 accumulator
    vmem_limit = int(min(max(2 * vmem_needed + (4 << 20), 32 << 20), 64 << 20))

    cost = pl.CostEstimate(
        flops=2 * M_pad * K_pad * N_pad,
        transcendentals=0,
        bytes_accessed=(M_pad * K_pad + K_pad * N_pad + N_pad
                        + M_pad * N_pad) * itemsize,
    )

    out_pad = pl.pallas_call(
        _patch_embed_kernel,
        out_shape=jax.ShapeDtypeStruct((M_pad, N_pad), x.dtype),
        grid_spec=pltpu.PrefetchScalarGridSpec(
            num_scalar_prefetch=0,
            grid=grid,
            in_specs=[
                pl.BlockSpec((TM, TK), lambda i, j, k: (i, k)),   # patch rows
                pl.BlockSpec((TK, TN), lambda i, j, k: (k, j)),   # weight tile
                pl.BlockSpec((1, TN),  lambda i, j, k: (0, j)),   # bias
            ],
            out_specs=pl.BlockSpec((TM, TN), lambda i, j, k: (i, j)),
            scratch_shapes=[pltpu.VMEM((TM, TN), jnp.float32)],
        ),
        compiler_params=pltpu.CompilerParams(
            dimension_semantics=("parallel", "parallel", "arbitrary"),
            vmem_limit_bytes=vmem_limit,
        ),
        cost_estimate=cost,
    )(patches_p, w_p, b_p)

    # Drop padding and restore (B, n_patches, d_model).
    return out_pad[:M, :d_model].reshape(B, n_patches, d_model)


if __name__ == "__main__":
    # Shapes implied by the module globals.
    d_model = 9
    img_size = (32, 32)
    n_channels = 1
    patch_size = (16, 16)
    batch = 2

    key = jax.random.PRNGKey(0)
    k_x, k_w, k_b = jax.random.split(key, 3)

    x = jax.random.normal(k_x, (batch, n_channels, *img_size), dtype=jnp.float32)

    # Deterministic Conv2d-style parameter init (uniform +-1/sqrt(fan_in)).
    fan_in = n_channels * patch_size[0] * patch_size[1]
    bound = 1.0 / float(np.sqrt(fan_in))
    weight = jax.random.uniform(k_w, (d_model, n_channels, *patch_size),
                                minval=-bound, maxval=bound, dtype=jnp.float32)
    bias = jax.random.uniform(k_b, (d_model,),
                              minval=-bound, maxval=bound, dtype=jnp.float32)

    fwd = jax.jit(patch_embeddings_forward, static_argnames=("patch_size",))
    out = jax.block_until_ready(fwd(x, weight, bias, patch_size=patch_size))

    # Reference: strided conv (== PyTorch Conv2d) + flatten(2) + transpose(1,2).
    ref_conv = lax.conv_general_dilated(
        x, weight, window_strides=patch_size, padding="VALID",
        dimension_numbers=("NCHW", "OIHW", "NCHW"),
    ) + bias[None, :, None, None]
    Hp, Wp = img_size[0] // patch_size[0], img_size[1] // patch_size[1]
    ref = ref_conv.reshape(batch, d_model, Hp * Wp).transpose(0, 2, 1)

    # DEFAULT-precision MXU path (bf16 multiplies, f32 accumulate) -> looser
    # tolerance than the old HIGHEST-precision check.
    np.testing.assert_allclose(np.asarray(out), np.asarray(ref),
                               rtol=2e-2, atol=2e-2)
    assert out.shape == (batch, Hp * Wp, d_model)
    print("KERNEL_OK")
</pallas_src>

<mosaic_0001>
module attributes {stable_mosaic.version = 11 : i64} {
  func.func @_patch_embed_kernel(%arg0: i32, %arg1: i32, %arg2: i32, %arg3: memref<8x256xf32, #tpu.memory_space<vmem>>, %arg4: memref<256x128xf32, #tpu.memory_space<vmem>>, %arg5: memref<1x128xf32, #tpu.memory_space<vmem>>, %arg6: memref<8x128xf32, #tpu.memory_space<vmem>>, %arg7: memref<8x128xf32, #tpu.memory_space<vmem>>) attributes {dimension_semantics = [#tpu.dimension_semantics<parallel>, #tpu.dimension_semantics<parallel>, #tpu.dimension_semantics<arbitrary>], iteration_bounds = array<i64: 1, 1, 1>, scalar_prefetch = 0 : i64, scratch_operands = 1 : i64, tpu.core_type = #tpu.core_type<tc>, window_params = [{transform_indices = @transform_0, window_bounds = array<i64: 8, 256>}, {transform_indices = @transform_1, window_bounds = array<i64: 256, 128>}, {transform_indices = @transform_2, window_bounds = array<i64: 1, 128>}, {transform_indices = @transform_3, window_bounds = array<i64: 8, 128>}]} {
    %c0_i32 = arith.constant 0 : i32
    %0 = arith.cmpi eq, %arg2, %c0_i32 : i32
    %1 = arith.extui %0 : i1 to i32
    %c0_i32_0 = arith.constant 0 : i32
    %2 = arith.cmpi ne, %1, %c0_i32_0 : i32
    scf.if %2 {
      %cst_10 = arith.constant 0.000000e+00 : f32
      %12 = vector.broadcast %cst_10 : f32 to vector<8x128xf32>
      %c0_11 = arith.constant 0 : index
      %c0_12 = arith.constant 0 : index
      %13 = vector.load %arg7[%c0_11, %c0_12] : memref<8x128xf32, #tpu.memory_space<vmem>>, vector<8x128xf32>
      tpu.vector_store %arg7[%c0_11, %c0_12], %12 {strides = array<i32>} : memref<8x128xf32, #tpu.memory_space<vmem>>, vector<8x128xf32>,
    } else {
    }
    %c0 = arith.constant 0 : index
    %c0_1 = arith.constant 0 : index
    %3 = vector.load %arg7[%c0, %c0_1] : memref<8x128xf32, #tpu.memory_space<vmem>>, vector<8x128xf32>
    %c0_2 = arith.constant 0 : index
    %c0_3 = arith.constant 0 : index
    %4 = vector.load %arg3[%c0_2, %c0_3] : memref<8x256xf32, #tpu.memory_space<vmem>>, vector<8x256xf32>
    %c0_4 = arith.constant 0 : index
    %c0_5 = arith.constant 0 : index
    %5 = vector.load %arg4[%c0_4, %c0_5] : memref<256x128xf32, #tpu.memory_space<vmem>>, vector<256x128xf32>
    %cst = arith.constant dense<0.000000e+00> : vector<8x128xf32>
    %6 = tpu.matmul %4, %5, %cst {dimension_numbers = #tpu.dot_dimension_numbers<[1], [0], [0], [1], [0, 0, 1, 1], [], []>} : vector<8x256xf32>, vector<256x128xf32>, vector<8x128xf32> -> vector<8x128xf32>
    %7 = arith.addf %3, %6 : vector<8x128xf32>
    %c0_6 = arith.constant 0 : index
    %c0_7 = arith.constant 0 : index
    %8 = vector.load %arg7[%c0_6, %c0_7] : memref<8x128xf32, #tpu.memory_space<vmem>>, vector<8x128xf32>
    tpu.vector_store %arg7[%c0_6, %c0_7], %7 {strides = array<i32>} : memref<8x128xf32, #tpu.memory_space<vmem>>, vector<8x128xf32>,
    %c0_i32_8 = arith.constant 0 : i32
    %9 = arith.cmpi eq, %arg2, %c0_i32_8 : i32
    %10 = arith.extui %9 : i1 to i32
    %c0_i32_9 = arith.constant 0 : i32
    %11 = arith.cmpi ne, %10, %c0_i32_9 : i32
    scf.if %11 {
      %c0_10 = arith.constant 0 : index
      %c0_11 = arith.constant 0 : index
      %12 = vector.load %arg7[%c0_10, %c0_11] : memref<8x128xf32, #tpu.memory_space<vmem>>, vector<8x128xf32>
      %c0_12 = arith.constant 0 : index
      %c0_13 = arith.constant 0 : index
      %13 = vector.load %arg5[%c0_12, %c0_13] : memref<1x128xf32, #tpu.memory_space<vmem>>, vector<1x128xf32>
      %14 = vector.broadcast %13 : vector<1x128xf32> to vector<8x128xf32>
      %15 = arith.addf %12, %14 : vector<8x128xf32>
      %c0_14 = arith.constant 0 : index
      %c0_15 = arith.constant 0 : index
      %16 = vector.load %arg6[%c0_14, %c0_15] : memref<8x128xf32, #tpu.memory_space<vmem>>, vector<8x128xf32>
      tpu.vector_store %arg6[%c0_14, %c0_15], %15 {strides = array<i32>} : memref<8x128xf32, #tpu.memory_space<vmem>>, vector<8x128xf32>,
    } else {
    }
    return
  }
  func.func @transform_0(%arg0: i32, %arg1: i32, %arg2: i32) -> (i32, i32) {
    %c0_i32 = arith.constant 0 : i32
    return %arg0, %arg2 : i32, i32
  }
  func.func @transform_1(%arg0: i32, %arg1: i32, %arg2: i32) -> (i32, i32) {
    %c0_i32 = arith.constant 0 : i32
    return %arg2, %arg1 : i32, i32
  }
  func.func @transform_2(%arg0: i32, %arg1: i32, %arg2: i32) -> (i32, i32) {
    %c0_i32 = arith.constant 0 : i32
    %c0_i32_0 = arith.constant 0 : i32
    return %c0_i32, %arg1 : i32, i32
  }
  func.func @transform_3(%arg0: i32, %arg1: i32, %arg2: i32) -> (i32, i32) {
    %c0_i32 = arith.constant 0 : i32
    return %arg0, %arg1 : i32, i32
  }
}

</mosaic_0001>

<llo_original>
// kernel: patch_embeddings_forward.1
$region0: #{patch_embeddings_forward.1}
  #allocation0 [shape = 'u32[]', space=smem, size = 0x4, offset = 0x4, fixed_abs, tag = 'smem constant byte address 0x4 - core index']
  #allocation1 [shape = 'u32[144,128]{1,0:T(1,128)}', space=vmem, size = 0x12000, scoped, tag = 'internal scratch']
  #allocation2 [shape = 'f32[8,128]{1,0:T(8,128)}', space=vmem, size = 0x1000, scoped, tag = 'scratch operand']
  %s0 = inlined_call_operand.vmem [shape: f32[8,256], index: 0, kind: input, shape index: {}]
  %s1 = inlined_call_operand.vmem [shape: f32[256,128], index: 1, kind: input, shape index: {}]
  %s2 = inlined_call_operand.vmem [shape: f32[1,128], index: 2, kind: input, shape index: {}]
  %s3 = inlined_call_operand.hbm [shape: f32[8,128], index: 3, kind: output, shape index: {}]
  %s4 = sld [smem:[#allocation0]]
  $region30: #{patch_embeddings_forward.1} parent=0
    _
  %s6 = ssub.s32 1, %s4
  %s7 = scalar_select 0, %s6, %s4
  $region1: #{patch_embeddings_forward.1} parent=0
    #allocation3 [shape = 'u8[4096]{0}', space=vmem, size = 0x1000, scoped, tag = 'output window, operand 0, single buffered']
    #allocation4 [shape = 's32[1]{0}', space=sflag, size = 0x4, scoped, tag = 'scoped memory for patch_embeddings_forward.1']
    %8 = vsyncpa [#allocation4], 0
    // Predicated region
    $region2: #{patch_embeddings_forward.1} parent=1 // pred_check
      _
    $region3: #{patch_embeddings_forward.1} parent=1 // pred_check_branch
      %10 = sbr.rel (0) target = $region5
    $region4: #{patch_embeddings_forward.1} parent=1 // pred_region
      _
    $region5: #{patch_embeddings_forward.1} parent=1 // pred_fallthru
      _
    // Predicated region
    $region6: #{patch_embeddings_forward.1} parent=1 // pred_check
      _
    $region7: #{patch_embeddings_forward.1} parent=1 // pred_check_branch
      %12 = sbr.rel (0) target = $region9
    $region8: #{patch_embeddings_forward.1} parent=1 // pred_region
      _
    $region9: #{patch_embeddings_forward.1} parent=1 // pred_fallthru
      _
    // Predicated region
    $region10: #{patch_embeddings_forward.1} parent=1 // pred_check
      _
    $region11: #{patch_embeddings_forward.1} parent=1 // pred_check_branch
      %14 = sbr.rel (0) target = $region13
    $region12: #{patch_embeddings_forward.1} parent=1 // pred_region
      _
    $region13: #{patch_embeddings_forward.1} parent=1 // pred_fallthru
      _
    %p15 = scmp.eq.s32.totalorder 0, 0
    // Predicated region
    $region14: #{patch_embeddings_forward.1} parent=1 // pred_check
      %p16 = pneg %p15
    $region15: #{patch_embeddings_forward.1} parent=1 // pred_check_branch
      %18 = sbr.rel (%p16) target = $region17
    $region16: #{patch_embeddings_forward.1} parent=1 // pred_region
      %19 = vst [vmem:[#allocation2] sm:$0xff] 0.0
    $region17: #{patch_embeddings_forward.1} parent=1 // pred_fallthru
      _
    %v20 = vld [vmem:[#allocation2] sm:$0xff]
    %v21 = vld [vmem:[%s0] sm:$0xff]
    %v22 = vld [vmem:[%s0 + $0x8] sm:$0xff]
    %v23 = vld [vmem:[%s1] sm:$0xff]
    %v24 = vld [vmem:[%s1 + $0x8] sm:$0xff]
    %v25 = vld [vmem:[%s1 + $0x10] sm:$0xff]
    %v26 = vld [vmem:[%s1 + $0x18] sm:$0xff]
    %v27 = vld [vmem:[%s1 + $0x20] sm:$0xff]
    %v28 = vld [vmem:[%s1 + $0x28] sm:$0xff]
    %v29 = vld [vmem:[%s1 + $0x30] sm:$0xff]
    %v30 = vld [vmem:[%s1 + $0x38] sm:$0xff]
    %v31 = vld [vmem:[%s1 + $0x40] sm:$0xff]
    %v32 = vld [vmem:[%s1 + $0x48] sm:$0xff]
    %v33 = vld [vmem:[%s1 + $0x50] sm:$0xff]
    %v34 = vld [vmem:[%s1 + $0x58] sm:$0xff]
    %v35 = vld [vmem:[%s1 + $0x60] sm:$0xff]
    %v36 = vld [vmem:[%s1 + $0x68] sm:$0xff]
    %v37 = vld [vmem:[%s1 + $0x70] sm:$0xff]
    %v38 = vld [vmem:[%s1 + $0x78] sm:$0xff]
    %v39 = vld [vmem:[%s1 + $0x80] sm:$0xff]
    %v40 = vld [vmem:[%s1 + $0x88] sm:$0xff]
    %v41 = vld [vmem:[%s1 + $0x90] sm:$0xff]
    %v42 = vld [vmem:[%s1 + $0x98] sm:$0xff]
    %v43 = vld [vmem:[%s1 + $0xa0] sm:$0xff]
    %v44 = vld [vmem:[%s1 + $0xa8] sm:$0xff]
    %v45 = vld [vmem:[%s1 + $0xb0] sm:$0xff]
    %v46 = vld [vmem:[%s1 + $0xb8] sm:$0xff]
    %v47 = vld [vmem:[%s1 + $0xc0] sm:$0xff]
    %v48 = vld [vmem:[%s1 + $0xc8] sm:$0xff]
    %v49 = vld [vmem:[%s1 + $0xd0] sm:$0xff]
    %v50 = vld [vmem:[%s1 + $0xd8] sm:$0xff]
    %v51 = vld [vmem:[%s1 + $0xe0] sm:$0xff]
    %v52 = vld [vmem:[%s1 + $0xe8] sm:$0xff]
    %v53 = vld [vmem:[%s1 + $0xf0] sm:$0xff]
    %v54 = vld [vmem:[%s1 + $0xf8] sm:$0xff]
    %55 = vmatprep.subr.mxu0 0.0
    %56 = vmatpush1.msra.mxu0 %v23
    %57 = vmatprep.subr.mxu0 0.0
    %58 = vmatpush1.msra.mxu0 %v24
    %59 = vmatprep.subr.mxu0 0.0
    %60 = vmatpush1.msra.mxu0 %v25
    %61 = vmatprep.subr.mxu0 0.0
    %62 = vmatpush1.msra.mxu0 %v26
    %63 = vmatprep.subr.mxu0 0.0
    %64 = vmatpush1.msra.mxu0 %v27
    %65 = vmatprep.subr.mxu0 0.0
    %66 = vmatpush1.msra.mxu0 %v28
    %67 = vmatprep.subr.mxu0 0.0
    %68 = vmatpush1.msra.mxu0 %v29
    %69 = vmatprep.subr.mxu0 0.0
    %70 = vmatpush1.msra.mxu0 %v30
    %71 = vmatprep.subr.mxu0 0.0
    %72 = vmatpush1.msra.mxu0 %v31
    %73 = vmatprep.subr.mxu0 0.0
    %74 = vmatpush1.msra.mxu0 %v32
    %75 = vmatprep.subr.mxu0 0.0
    %76 = vmatpush1.msra.mxu0 %v33
    %77 = vmatprep.subr.mxu0 0.0
    %78 = vmatpush1.msra.mxu0 %v34
    %79 = vmatprep.subr.mxu0 0.0
    %80 = vmatpush1.msra.mxu0 %v35
    %81 = vmatprep.subr.mxu0 0.0
    %82 = vmatpush1.msra.mxu0 %v36
    %83 = vmatprep.subr.mxu0 0.0
    %84 = vmatpush1.msra.mxu0 %v37
    %85 = vmatprep.subr.mxu0 0.0
    %86 = vmatpush1.msra.mxu0 %v38
    %87 = vmatprep.subr.mxu0 0.0
    %88 = vmatpush1.msra.mxu0 %v39
    %89 = vmatprep.subr.mxu0 0.0
    %90 = vmatpush1.msra.mxu0 %v40
    %91 = vmatprep.subr.mxu0 0.0
    %92 = vmatpush1.msra.mxu0 %v41
    %93 = vmatprep.subr.mxu0 0.0
    %94 = vmatpush1.msra.mxu0 %v42
    %95 = vmatprep.subr.mxu0 0.0
    %96 = vmatpush1.msra.mxu0 %v43
    %97 = vmatprep.subr.mxu0 0.0
    %98 = vmatpush1.msra.mxu0 %v44
    %99 = vmatprep.subr.mxu0 0.0
    %100 = vmatpush1.msra.mxu0 %v45
    %101 = vmatprep.subr.mxu0 0.0
    %102 = vmatpush1.msra.mxu0 %v46
    %103 = vmatprep.subr.mxu0 0.0
    %104 = vmatpush1.msra.mxu0 %v47
    %105 = vmatprep.subr.mxu0 0.0
    %106 = vmatpush1.msra.mxu0 %v48
    %107 = vmatprep.subr.mxu0 0.0
    %108 = vmatpush1.msra.mxu0 %v49
    %109 = vmatprep.subr.mxu0 0.0
    %110 = vmatpush1.msra.mxu0 %v50
    %111 = vmatprep.subr.mxu0 0.0
    %112 = vmatpush1.msra.mxu0 %v51
    %113 = vmatprep.subr.mxu0 0.0
    %114 = vmatpush1.msra.mxu0 %v52
    %115 = vmatprep.subr.mxu0 0.0
    %116 = vmatpush1.msra.mxu0 %v53
    %117 = vmatprep.subr.mxu0 0.0
    %118 = vmatpush1.msra.mxu0 %v54
    %119 = vmatprep.mubr.f32.mxu0 %v22
    %120 = vmatmul.mubr.f32.gmra.mrb[0].mxu0 %v21
    %v121 = vpop.f32.mrb[0].mxu0
    %v122 = vadd.f32 0.0, %v121
    %v123 = vpop.f32.mrb[0].mxu0
    %124 = vdwg.mxu0
    %v125 = vadd.f32 %v20, %v122
    %126 = vst [vmem:[#allocation2] sm:$0xff] %v125
    // Predicated region
    $region18: #{patch_embeddings_forward.1} parent=1 // pred_check
      %p127 = pneg %p15
    $region19: #{patch_embeddings_forward.1} parent=1 // pred_check_branch
      %129 = sbr.rel (%p127) target = $region21
    $region20: #{patch_embeddings_forward.1} parent=1 // pred_region
      %v130 = vld [vmem:[#allocation2] sm:$0xff]
      %v131 = vld [vmem:[%s2] sm:$0x1]
      %v133 = vlaneseq
      %v134 = vshrl.u32 %v133, 7
      %v135 = vsub.s32 0, %v134
      %v136 = vrot.slane %v131, %v135
      %v138 = vadd.f32 %v130, %v136
      %139 = vst [vmem:[#allocation3] sm:$0xff] %v138
    $region21: #{patch_embeddings_forward.1} parent=1 // pred_fallthru
      _
    // Predicated region
    $region22: #{patch_embeddings_forward.1} parent=1 // pred_check
      _
    $region23: #{patch_embeddings_forward.1} parent=1 // pred_check_branch
      %141 = sbr.rel (0) target = $region25
    $region24: #{patch_embeddings_forward.1} parent=1 // pred_region
      %s143 = ssub.s32 128, 128
      %144 = vsyncadd [#allocation4], %s143
      %s146 = sshll.u32 [#allocation3], 4
      %s147 = int_to_ptr.vmem [resolvable:$true] %s146
      %149 = dma.vmem_to_hbm [thread:$0]  %s147, 128, %s3, [#allocation4]
    $region25: #{patch_embeddings_forward.1} parent=1 // pred_fallthru
      _
    // Predicated region
    $region26: #{patch_embeddings_forward.1} parent=1 // pred_check
      _
    $region27: #{patch_embeddings_forward.1} parent=1 // pred_check_branch
      %151 = sbr.rel (0) target = $region29
    $region28: #{patch_embeddings_forward.1} parent=1 // pred_region
      %152 = dma.done [#allocation4], 128
    $region29: #{patch_embeddings_forward.1} parent=1 // pred_fallthru
      _
    %153 = vsyncpa [#allocation4], 1

</llo_original>
